<compile_context>
chip_gen: v5e
topology: v5e:2x2
jax: 0.10.0
libtpu: 0.0.40
codegen_flags: <defaults>
</compile_context>

<pallas_src>
import functools
import math

import jax
import jax.numpy as jnp
from jax.experimental import pallas as pl
from jax.experimental.pallas import tpu as pltpu


def _make_layer_channels():
    chans = []
    cin = 48
    for _ in range(6):                      # 6 x block3
        chans += [(cin, 24), (24, 24), (24, 96)]
        cin = 96
    return tuple(chans)


_LAYER_CHANNELS = _make_layer_channels()    # 18 (cin, cout) pairs
_CMAX = 96                                  # widest activation channel count


# ---------------------------------------------------------------------------
# Roll-direction probe: one trivial compiled kernel that pins down whether
# pltpu.roll matches jnp.roll (result[i] = x[i - shift]) on this build.
# ---------------------------------------------------------------------------
def _probe_roll_sign():
    def k(x_ref, o_ref):
        o_ref[...] = pltpu.roll(x_ref[...], shift=1, axis=1)

    x = jnp.arange(8 * 128, dtype=jnp.float32).reshape(8, 128)
    y = pl.pallas_call(k, out_shape=jax.ShapeDtypeStruct((8, 128), jnp.float32))(x)
    jax.block_until_ready(y)
    # jnp.roll semantics => y[0,1] == x[0,0] => to read x[s + d] use shift = -d.
    return -1 if float(y[0, 1]) == float(x[0, 0]) else 1


# ---------------------------------------------------------------------------
# Fused enc3 kernel (18 depthwise-separable layers in one pallas_call).
# ---------------------------------------------------------------------------
def _make_enc3_kernel(row_stride, s_pad, roll_sign):
    n_layers = len(_LAYER_CHANNELS)

    def kernel(x_ref, mask_ref, wd_ref, wp_ref, ba_ref, o_ref, buf_a, buf_b):
        mask = mask_ref[...]                        # (1, s_pad): 1 interior, 0 halo
        bufs = (buf_a, buf_b)
        read = -1                                   # -1 -> layer 0 reads x_ref

        for l, (cin, cout) in enumerate(_LAYER_CHANNELS):
            wblk = wd_ref[0:cin, 9 * l:9 * l + 9]   # (cin, 9) depthwise taps

            # ---- depthwise 3x3: 9 lane-rolled MACs (shifts on the XLU) ------
            acc = None
            for kh in range(3):
                for kw in range(3):
                    # Re-read the source per tap: keeps vreg pressure low; the
                    # vld slots have ample slack.
                    if read < 0:
                        src = x_ref[0]                        # (48, s_pad)
                    else:
                        src = bufs[read][0:cin, :]            # (cin, s_pad)
                    d = (kh - 1) * row_stride + (kw - 1)      # lane offset of tap
                    if d == 0:
                        t = src
                    else:
                        t = pltpu.roll(src, shift=(roll_sign * d) % s_pad, axis=1)
                    contrib = t * wblk[:, 3 * kh + kw:3 * kh + kw + 1]
                    acc = contrib if acc is None else acc + contrib

            # ---- pointwise 1x1 (BN scale folded) on the MXU, bias + PReLU ---
            y = jnp.dot(wp_ref[l, 0:cout, 0:cin], acc,
                        preferred_element_type=jnp.float32)   # (cout, s_pad)
            y = y + ba_ref[0, 0:cout, l:l + 1]
            y = jnp.where(y > 0.0, y, ba_ref[1, 0:cout, l:l + 1] * y)

            if l + 1 < n_layers:
                # Re-zero the halo lanes so the next depthwise reads true zeros.
                dst = 0 if read < 0 else 1 - read
                bufs[dst][0:cout, :] = y * mask
                read = dst
            else:
                o_ref[0] = y                                  # (96, s_pad), lane-dense

    return kernel


def enc3_forward(x_nchw, packed, roll_sign):
    """Fused enc3 forward.  x_nchw: (N, 48, H, W) f32 -> (N, 96, H, W) f32."""
    wd_all, wp_all, ba_all = packed
    n, c0, h, w = x_nchw.shape
    s = (h + 2) * (w + 2)
    s_pad = ((s + 127) // 128) * 128

    # Channels on sublanes, flattened zero-padded spatial on lanes.
    xp = jnp.pad(x_nchw, ((0, 0), (0, 0), (1, 1), (1, 1))).reshape(n, c0, s)
    xp = jnp.pad(xp, ((0, 0), (0, 0), (0, s_pad - s)))

    interior = jnp.zeros((h + 2, w + 2), jnp.float32).at[1:h + 1, 1:w + 1].set(1.0)
    mask = jnp.pad(interior.reshape(1, s), ((0, 0), (0, s_pad - s)))

    kernel = _make_enc3_kernel(w + 2, s_pad, roll_sign)
    out = pl.pallas_call(
        kernel,
        out_shape=jax.ShapeDtypeStruct((n, _CMAX, s_pad), jnp.float32),
        grid_spec=pltpu.PrefetchScalarGridSpec(
            num_scalar_prefetch=0,
            grid=(n,),
            in_specs=[
                pl.BlockSpec((1, c0, s_pad), lambda i: (i, 0, 0)),
                pl.BlockSpec(mask.shape, lambda i: (0, 0)),
                pl.BlockSpec(wd_all.shape, lambda i: (0, 0)),
                pl.BlockSpec(wp_all.shape, lambda i: (0, 0, 0)),
                pl.BlockSpec(ba_all.shape, lambda i: (0, 0, 0)),
            ],
            out_specs=pl.BlockSpec((1, _CMAX, s_pad), lambda i: (i, 0, 0)),
            scratch_shapes=[pltpu.VMEM((_CMAX, s_pad), jnp.float32),
                            pltpu.VMEM((_CMAX, s_pad), jnp.float32)],
        ),
        compiler_params=pltpu.CompilerParams(
            dimension_semantics=("parallel",)),
    )(xp, mask, wd_all, wp_all, ba_all)

    # Extract the interior of the padded spatial; output is already NCHW.
    out = out[:, :, :s].reshape(n, _CMAX, h + 2, w + 2)[:, :, 1:h + 1, 1:w + 1]
    return out


# ---------------------------------------------------------------------------
# Parameter init, BN/bias folding + packing, and a pure-JAX reference.
# ---------------------------------------------------------------------------
def init_dsc_params(key, cin, cout):
    ks = jax.random.split(key, 8)
    wd = jax.random.normal(ks[0], (3, 3, cin), jnp.float32) * (1.0 / 3.0)
    bd = jax.random.normal(ks[1], (cin,), jnp.float32) * 0.05
    wp_std = math.sqrt(2.0 / (1.0 + 0.25 ** 2)) / math.sqrt(cin)
    wp = jax.random.normal(ks[2], (cin, cout), jnp.float32) * wp_std
    bp = jax.random.normal(ks[3], (cout,), jnp.float32) * 0.05
    gamma = 1.0 + 0.1 * jax.random.normal(ks[4], (cout,), jnp.float32)
    beta = 0.1 * jax.random.normal(ks[5], (cout,), jnp.float32)
    mean = 0.1 * jax.random.normal(ks[6], (cout,), jnp.float32)
    var = 0.8 + 0.4 * jax.random.uniform(ks[7], (cout,), jnp.float32)
    return dict(wd=wd, bd=bd, wp=wp, bp=bp, gamma=gamma, beta=beta,
                mean=mean, var=var, alpha=jnp.float32(0.25))


def init_enc3_params(key):
    keys = jax.random.split(key, len(_LAYER_CHANNELS))
    return [init_dsc_params(k, cin, cout)
            for k, (cin, cout) in zip(keys, _LAYER_CHANNELS)]


def fold_and_pack_params(params):
    """Fold (depthwise bias, pointwise bias, BN) and pack 18 layers into 3 arrays."""
    eps = 1e-5
    nl = len(params)
    wd_all = jnp.zeros((_CMAX, 9 * nl), jnp.float32)       # [ci, 9*l + kh*3+kw]
    wp_all = jnp.zeros((nl, _CMAX, _CMAX), jnp.float32)     # [l, co, ci] (BN-scaled)
    ba_all = jnp.zeros((2, _CMAX, nl), jnp.float32)         # [0]=bias, [1]=PReLU alpha
    for l, p in enumerate(params):
        cin, cout = p["wp"].shape
        scale = p["gamma"] / jnp.sqrt(p["var"] + eps)
        shift = p["beta"] - p["mean"] * scale
        wd = p["wd"].reshape(9, cin)                        # [kh*3+kw, ci]
        wd_all = wd_all.at[:cin, 9 * l:9 * l + 9].set(wd.T)
        wp_all = wp_all.at[l, :cout, :cin].set((p["wp"] * scale[None, :]).T)
        bias = (p["bd"] @ p["wp"] + p["bp"]) * scale + shift
        ba_all = ba_all.at[0, :cout, l].set(bias)
        ba_all = ba_all.at[1, :cout, l].set(jnp.full((cout,), p["alpha"], jnp.float32))
    return wd_all, wp_all, ba_all


def dsc_reference(x, p):
    cin = p["wd"].shape[-1]
    y = jax.lax.conv_general_dilated(
        x, p["wd"].reshape(3, 3, 1, cin),
        window_strides=(1, 1), padding="SAME",
        dimension_numbers=("NHWC", "HWIO", "NHWC"),
        feature_group_count=cin,
        precision=jax.lax.Precision.HIGHEST)
    y = y + p["bd"]
    y = jnp.einsum("nhwi,io->nhwo", y, p["wp"],
                   precision=jax.lax.Precision.HIGHEST) + p["bp"]
    eps = 1e-5
    scale = p["gamma"] / jnp.sqrt(p["var"] + eps)
    shift = p["beta"] - p["mean"] * scale
    y = y * scale + shift
    return jnp.where(y > 0, y, p["alpha"] * y)


def enc3_reference(x, params):
    for p in params:
        x = dsc_reference(x, p)         # Dropout2d is identity at eval time
    return x


# ---------------------------------------------------------------------------
if __name__ == "__main__":
    key = jax.random.PRNGKey(0)
    kx, kp = jax.random.split(key)

    # PyTorch-equivalent input: NCHW (2, 48, 16, 16)
    x_nchw = jax.random.normal(kx, (2, 48, 16, 16), jnp.float32)
    raw_params = init_enc3_params(kp)
    packed = fold_and_pack_params(raw_params)

    roll_sign = _probe_roll_sign()

    fwd = jax.jit(functools.partial(enc3_forward, roll_sign=roll_sign))
    out_nchw = fwd(x_nchw, packed)
    jax.block_until_ready(out_nchw)

    assert out_nchw.shape == (2, 96, 16, 16), out_nchw.shape
    assert bool(jnp.all(jnp.isfinite(out_nchw)))

    # Validate against a plain-JAX eval-mode reference of the PyTorch module.
    x_nhwc = jnp.transpose(x_nchw, (0, 2, 3, 1))
    ref_nhwc = enc3_reference(x_nhwc, raw_params)
    ref_nchw = jnp.transpose(ref_nhwc, (0, 3, 1, 2))
    max_err = float(jnp.max(jnp.abs(out_nchw - ref_nchw)))
    ref_scale = float(jnp.max(jnp.abs(ref_nchw)))
    assert max_err <= 5e-2 * max(ref_scale, 1e-3), (max_err, ref_scale)

    print("KERNEL_OK")
</pallas_src>

<mosaic_0001>
module attributes {stable_mosaic.version = 11 : i64} {
  func.func @k(%arg0: memref<8x128xf32, #tpu.memory_space<vmem>>, %arg1: memref<8x128xf32, #tpu.memory_space<vmem>>) attributes {dimension_semantics = [], scalar_prefetch = 0 : i64, scratch_operands = 0 : i64, tpu.core_type = #tpu.core_type<tc>} {
    %c0 = arith.constant 0 : index
    %c0_0 = arith.constant 0 : index
    %0 = vector.load %arg0[%c0, %c0_0] : memref<8x128xf32, #tpu.memory_space<vmem>>, vector<8x128xf32>
    %c1_i32 = arith.constant 1 : i32
    %1 = tpu.dynamic_rotate %0 by %c1_i32 dim 1 : vector<8x128xf32>, i32 -> vector<8x128xf32>
    %c0_1 = arith.constant 0 : index
    %c0_2 = arith.constant 0 : index
    %2 = vector.load %arg1[%c0_1, %c0_2] : memref<8x128xf32, #tpu.memory_space<vmem>>, vector<8x128xf32>
    tpu.vector_store %arg1[%c0_1, %c0_2], %1 {strides = array<i32>} : memref<8x128xf32, #tpu.memory_space<vmem>>, vector<8x128xf32>,
    return
  }
}

</mosaic_0001>

<llo_original>
// kernel: tpu_custom_call.1
$region0: #{tpu_custom_call.1}
  #allocation0 [shape = 'u32[]', space=smem, size = 0x4, offset = 0x4, fixed_abs, tag = 'smem constant byte address 0x4 - core index']
  #allocation1 [shape = 'u32[72,128]{1,0:T(1,128)}', space=vmem, size = 0x9000, scoped, tag = 'internal scratch']
  %s0 = inlined_call_operand.hbm [shape: f32[8,128], index: 0, kind: input, shape index: {}]
  %s1 = inlined_call_operand.hbm [shape: f32[8,128], index: 1, kind: output, shape index: {}]
  %s2 = sld [smem:[#allocation0]]
  $region18: #{tpu_custom_call.1} parent=0
    _
  %s4 = ssub.s32 1, %s2
  %s5 = scalar_select 0, %s4, %s2
  $region1: #{tpu_custom_call.1} parent=0
    #allocation2 [shape = 'u8[4096]{0}', space=vmem, size = 0x1000, scoped, tag = 'input window, operand 0, single buffered']
    #allocation3 [shape = 's32[1]{0}', space=sflag, size = 0x4, scoped, tag = 'scoped memory for tpu_custom_call.1']
    #allocation4 [shape = 's32[1]{0}', space=sflag, size = 0x4, scoped, tag = 'scoped memory for tpu_custom_call.1']
    #allocation5 [shape = 'u8[4096]{0}', space=vmem, size = 0x1000, scoped, tag = 'output window, operand 0, single buffered']
    %6 = vsyncpa [#allocation3], 0
    %7 = vsyncpa [#allocation4], 0
    // Predicated region
    $region2: #{tpu_custom_call.1} parent=1 // pred_check
      _
    $region3: #{tpu_custom_call.1} parent=1 // pred_check_branch
      %9 = sbr.rel (0) target = $region5
    $region4: #{tpu_custom_call.1} parent=1 // pred_region
      %11 = vsyncadd [#allocation3], 0
      %s13 = sshll.u32 %s0, 4
      %s14 = int_to_ptr.hbm [resolvable:$true] %s13
      %s15 = sshll.u32 [#allocation2], 4
      %s16 = int_to_ptr.vmem [resolvable:$true] %s15
      %18 = dma.hbm_to_vmem [thread:$0]  %s14, 128, %s16, [#allocation3]
    $region5: #{tpu_custom_call.1} parent=1 // pred_fallthru
      _
    // Predicated region
    $region6: #{tpu_custom_call.1} parent=1 // pred_check
      _
    $region7: #{tpu_custom_call.1} parent=1 // pred_check_branch
      %20 = sbr.rel (0) target = $region9
    $region8: #{tpu_custom_call.1} parent=1 // pred_region
      %22 = dma.done [#allocation3], 128
    $region9: #{tpu_custom_call.1} parent=1 // pred_fallthru
      _
    %v23 = vld [vmem:[#allocation2] sm:$0xff]
    %24 = vrot.lane.b32.xlu0 %v23, 1
    %v25 = vpop.permute.xlu0 %24
    %26 = vst [vmem:[#allocation5] sm:$0xff] %v25
    // Predicated region
    $region10: #{tpu_custom_call.1} parent=1 // pred_check
      _
    $region11: #{tpu_custom_call.1} parent=1 // pred_check_branch
      %28 = sbr.rel (0) target = $region13
    $region12: #{tpu_custom_call.1} parent=1 // pred_region
      %30 = vsyncadd [#allocation4], 0
      %s32 = sshll.u32 [#allocation5], 4
      %s33 = int_to_ptr.vmem [resolvable:$true] %s32
      %s34 = sshll.u32 %s1, 4
      %s35 = int_to_ptr.hbm [resolvable:$true] %s34
      %37 = dma.vmem_to_hbm [thread:$0]  %s33, 128, %s35, [#allocation4]
    $region13: #{tpu_custom_call.1} parent=1 // pred_fallthru
      _
    // Predicated region
    $region14: #{tpu_custom_call.1} parent=1 // pred_check
      _
    $region15: #{tpu_custom_call.1} parent=1 // pred_check_branch
      %39 = sbr.rel (0) target = $region17
    $region16: #{tpu_custom_call.1} parent=1 // pred_region
      %41 = dma.done [#allocation4], 128
    $region17: #{tpu_custom_call.1} parent=1 // pred_fallthru
      _
    %42 = vsyncpa [#allocation3], 1
    %43 = vsyncpa [#allocation4], 1

</llo_original>
